<compile_context>
chip_gen: v6e
topology: v6e:2x2x1
jax: 0.10.0
libtpu: 0.0.40
codegen_flags: <defaults>
</compile_context>

<pallas_src>
import functools

import jax
import jax.numpy as jnp
from jax.experimental import pallas as pl
from jax.experimental.pallas import tpu as pltpu


def _gaussian_sampling_kernel(h_ref, eps_ref, w_ref, b_ref, out_ref, *, d_z):
    h = h_ref[...]

    # Fused linear: [mu | logvar] = h @ [W_mu | W_lv] + [b_mu | b_lv]
    acc = jnp.dot(h, w_ref[...], preferred_element_type=jnp.float32)
    acc = acc + b_ref[...]                      # single broadcast bias add

    mu = acc[:, :d_z]
    # clamp(-1e-10, 10) exactly as the PyTorch module.
    lv = jnp.clip(acc[:, d_z:], -1e-10, 10.0)

    # Reparameterization: eps comes in row-tiled from the wrapper.
    z = mu + jnp.exp(lv * 0.5) * eps_ref[...]

    # Packed output slab [z | mu | logvar]: one writeback DMA per row tile,
    # written with sliced stores (no lane-axis concatenate temp).
    out_ref[:, :d_z] = z.astype(out_ref.dtype)
    out_ref[:, d_z:2 * d_z] = mu.astype(out_ref.dtype)
    out_ref[:, 2 * d_z:] = lv.astype(out_ref.dtype)


def _round_up(x, m):
    return ((x + m - 1) // m) * m


def gaussian_sampling(h, w_mu, b_mu, w_lv, b_lv, key, *, block_rows=1024):
    """h: (B, d_last); w_*: (d_last, d_z); b_*: (1, d_z); key: jax PRNG key.

    Returns (z, mu, logvar), each (B, d_z) float32.
    """
    B, d_last = h.shape
    d_z = w_mu.shape[1]

    # Fuse weights / biases once on the wrapper side (tiny one-time XLA concat).
    w = jnp.concatenate([w_mu, w_lv], axis=1)          # (d_last, 2*d_z)
    b = jnp.concatenate([b_mu, b_lv], axis=1)          # (1, 2*d_z)

    # Host-side Gaussian noise (reproducible, tiling-independent).
    eps = jax.random.normal(key, (B, d_z), dtype=jnp.float32)

    # ---- Row-tile selection --------------------------------------------
    tb = min(block_rows, B)

    # v7x megacore: if the batch is large but fits a single tile, split it so
    # the "parallel" grid axis actually has >= 2 steps (one per TensorCore).
    if B >= 512 and pl.cdiv(B, tb) < 2:
        tb = _round_up(pl.cdiv(B, 2), 8)

    # VMEM budget (conservative for v7x: 64 MiB physical / 32 MiB scoped
    # default).  Double-buffered per-step tiles + resident fused weights/bias.
    vmem_budget = 24 * 1024 * 1024

    def _vmem_bytes(t):
        per_step = t * (d_last + d_z + 3 * d_z) * 4    # h + eps + packed out
        resident = (d_last * 2 * d_z + 2 * d_z) * 4    # fused W + bias
        return 2 * per_step + 2 * resident

    while tb > 8 and _vmem_bytes(tb) > vmem_budget:
        tb = max(8, _round_up(tb // 2, 8))

    grid = (pl.cdiv(B, tb),)

    # Advisory cost for XLA's scheduler around the custom call.
    cost = pl.CostEstimate(
        flops=2 * B * d_last * (2 * d_z),
        transcendentals=B * d_z,
        bytes_accessed=4 * (B * (d_last + d_z + 3 * d_z)
                            + d_last * 2 * d_z + 2 * d_z),
    )

    kernel = functools.partial(_gaussian_sampling_kernel, d_z=d_z)

    packed = pl.pallas_call(
        kernel,
        out_shape=jax.ShapeDtypeStruct((B, 3 * d_z), jnp.float32),
        grid=grid,
        in_specs=[
            # activations / noise: tiled over rows
            pl.BlockSpec((tb, d_last), lambda i: (i, 0)),
            pl.BlockSpec((tb, d_z), lambda i: (i, 0)),
            # fused weight / bias: resident across the whole grid
            pl.BlockSpec((d_last, 2 * d_z), lambda i: (0, 0)),
            pl.BlockSpec((1, 2 * d_z), lambda i: (0, 0)),
        ],
        out_specs=pl.BlockSpec((tb, 3 * d_z), lambda i: (i, 0)),
        compiler_params=pltpu.CompilerParams(
            dimension_semantics=("parallel",),
            vmem_limit_bytes=32 * 1024 * 1024,
        ),
        cost_estimate=cost,
    )(h, eps, w, b)

    z = packed[:, :d_z]
    mu = packed[:, d_z:2 * d_z]
    logvar = packed[:, 2 * d_z:]
    return z, mu, logvar


if __name__ == "__main__":
    # Module config: input_size=32, d_z=16, bidirectional=False -> d_last=32.
    B, d_last, d_z = 8, 32, 16

    key = jax.random.PRNGKey(0)
    k_h, k_wm, k_bm, k_wl, k_bl, k_eps = jax.random.split(key, 6)

    # Deterministic "Linear" parameter init (uniform +-1/sqrt(fan_in), like PyTorch).
    bound = 1.0 / (d_last ** 0.5)
    h = jax.random.normal(k_h, (B, d_last), dtype=jnp.float32)
    w_mu = jax.random.uniform(k_wm, (d_last, d_z), jnp.float32, -bound, bound)
    b_mu = jax.random.uniform(k_bm, (1, d_z), jnp.float32, -bound, bound)
    w_lv = jax.random.uniform(k_wl, (d_last, d_z), jnp.float32, -bound, bound)
    b_lv = jax.random.uniform(k_bl, (1, d_z), jnp.float32, -bound, bound)

    z, mu, logvar = gaussian_sampling(h, w_mu, b_mu, w_lv, b_lv, k_eps)
    jax.block_until_ready((z, mu, logvar))

    # Exact check against a pure-JAX reference (eps is reproducible now).
    eps_ref = jax.random.normal(k_eps, (B, d_z), dtype=jnp.float32)
    mu_ref = h @ w_mu + b_mu
    lv_ref = jnp.clip(h @ w_lv + b_lv, -1e-10, 10.0)
    z_ref = mu_ref + jnp.exp(lv_ref * 0.5) * eps_ref

    assert jnp.allclose(mu, mu_ref, atol=1e-5)
    assert jnp.allclose(logvar, lv_ref, atol=1e-5)
    assert jnp.allclose(z, z_ref, atol=1e-5)

    print("KERNEL_OK")
</pallas_src>

<mosaic_0001>
module attributes {stable_mosaic.version = 11 : i64} {
  func.func @_gaussian_sampling_kernel(%arg0: i32, %arg1: memref<8x32xf32, #tpu.memory_space<vmem>>, %arg2: memref<8x16xf32, #tpu.memory_space<vmem>>, %arg3: memref<32x32xf32, #tpu.memory_space<vmem>>, %arg4: memref<1x32xf32, #tpu.memory_space<vmem>>, %arg5: memref<8x48xf32, #tpu.memory_space<vmem>>) attributes {dimension_semantics = [#tpu.dimension_semantics<parallel>], iteration_bounds = array<i64: 1>, scalar_prefetch = 0 : i64, scratch_operands = 0 : i64, tpu.core_type = #tpu.core_type<tc>, window_params = [{transform_indices = @transform_0, window_bounds = array<i64: 8, 32>}, {transform_indices = @transform_1, window_bounds = array<i64: 8, 16>}, {pipeline_mode = #tpu.pipeline_mode<synchronous>, transform_indices = @transform_2, window_bounds = array<i64: 32, 32>}, {pipeline_mode = #tpu.pipeline_mode<synchronous>, transform_indices = @transform_3, window_bounds = array<i64: 1, 32>}, {transform_indices = @transform_4, window_bounds = array<i64: 8, 48>}]} {
    %c0 = arith.constant 0 : index
    %c0_0 = arith.constant 0 : index
    %0 = vector.load %arg1[%c0, %c0_0] : memref<8x32xf32, #tpu.memory_space<vmem>>, vector<8x32xf32>
    %c0_1 = arith.constant 0 : index
    %c0_2 = arith.constant 0 : index
    %1 = vector.load %arg3[%c0_1, %c0_2] : memref<32x32xf32, #tpu.memory_space<vmem>>, vector<32x32xf32>
    %cst = arith.constant dense<0.000000e+00> : vector<8x32xf32>
    %2 = tpu.matmul %0, %1, %cst {dimension_numbers = #tpu.dot_dimension_numbers<[1], [0], [0], [1], [0, 0, 1, 1], [], []>} : vector<8x32xf32>, vector<32x32xf32>, vector<8x32xf32> -> vector<8x32xf32>
    %c0_3 = arith.constant 0 : index
    %c0_4 = arith.constant 0 : index
    %3 = vector.load %arg4[%c0_3, %c0_4] : memref<1x32xf32, #tpu.memory_space<vmem>>, vector<1x32xf32>
    %4 = vector.broadcast %3 : vector<1x32xf32> to vector<8x32xf32>
    %5 = arith.addf %2, %4 : vector<8x32xf32>
    %6 = vector.extract_strided_slice %5 {offsets = [0, 0], sizes = [8, 16], strides = [1, 1]} : vector<8x32xf32> to vector<8x16xf32>
    %7 = vector.extract_strided_slice %5 {offsets = [0, 16], sizes = [8, 16], strides = [1, 1]} : vector<8x32xf32> to vector<8x16xf32>
    %cst_5 = arith.constant -1.000000e-10 : f32
    %cst_6 = arith.constant 1.000000e+01 : f32
    %8 = vector.broadcast %cst_5 : f32 to vector<8x16xf32>
    %9 = arith.maximumf %8, %7 : vector<8x16xf32>
    %10 = vector.broadcast %cst_6 : f32 to vector<8x16xf32>
    %11 = arith.minimumf %10, %9 : vector<8x16xf32>
    %cst_7 = arith.constant 5.000000e-01 : f32
    %12 = vector.broadcast %cst_7 : f32 to vector<8x16xf32>
    %13 = arith.mulf %11, %12 : vector<8x16xf32>
    %14 = math.exp %13 : vector<8x16xf32>
    %c0_8 = arith.constant 0 : index
    %c0_9 = arith.constant 0 : index
    %15 = vector.load %arg2[%c0_8, %c0_9] : memref<8x16xf32, #tpu.memory_space<vmem>>, vector<8x16xf32>
    %16 = arith.mulf %14, %15 : vector<8x16xf32>
    %17 = arith.addf %6, %16 : vector<8x16xf32>
    %c0_10 = arith.constant 0 : index
    %c0_11 = arith.constant 0 : index
    %18 = vector.load %arg5[%c0_10, %c0_11] : memref<8x48xf32, #tpu.memory_space<vmem>>, vector<8x16xf32>
    tpu.vector_store %arg5[%c0_10, %c0_11], %17 {strides = array<i32>} : memref<8x48xf32, #tpu.memory_space<vmem>>, vector<8x16xf32>,
    %c0_12 = arith.constant 0 : index
    %c16 = arith.constant 16 : index
    %19 = vector.load %arg5[%c0_12, %c16] : memref<8x48xf32, #tpu.memory_space<vmem>>, vector<8x16xf32>
    tpu.vector_store %arg5[%c0_12, %c16], %6 {strides = array<i32>} : memref<8x48xf32, #tpu.memory_space<vmem>>, vector<8x16xf32>,
    %c0_13 = arith.constant 0 : index
    %c32 = arith.constant 32 : index
    %20 = vector.load %arg5[%c0_13, %c32] : memref<8x48xf32, #tpu.memory_space<vmem>>, vector<8x16xf32>
    tpu.vector_store %arg5[%c0_13, %c32], %11 {strides = array<i32>} : memref<8x48xf32, #tpu.memory_space<vmem>>, vector<8x16xf32>,
    return
  }
  func.func @transform_0(%arg0: i32) -> (i32, i32) {
    %c0_i32 = arith.constant 0 : i32
    %c0_i32_0 = arith.constant 0 : i32
    return %arg0, %c0_i32 : i32, i32
  }
  func.func @transform_1(%arg0: i32) -> (i32, i32) {
    %c0_i32 = arith.constant 0 : i32
    %c0_i32_0 = arith.constant 0 : i32
    return %arg0, %c0_i32 : i32, i32
  }
  func.func @transform_2(%arg0: i32) -> (i32, i32) {
    %c0_i32 = arith.constant 0 : i32
    %c0_i32_0 = arith.constant 0 : i32
    %c0_i32_1 = arith.constant 0 : i32
    return %c0_i32, %c0_i32_0 : i32, i32
  }
  func.func @transform_3(%arg0: i32) -> (i32, i32) {
    %c0_i32 = arith.constant 0 : i32
    %c0_i32_0 = arith.constant 0 : i32
    %c0_i32_1 = arith.constant 0 : i32
    return %c0_i32, %c0_i32_0 : i32, i32
  }
  func.func @transform_4(%arg0: i32) -> (i32, i32) {
    %c0_i32 = arith.constant 0 : i32
    %c0_i32_0 = arith.constant 0 : i32
    return %arg0, %c0_i32 : i32, i32
  }
}

</mosaic_0001>

<llo_original>
// kernel: tpu_custom_call.1
$region0: #{tpu_custom_call.1}
  #allocation0 [shape = 'u32[]', space=smem, size = 0x4, offset = 0x4, fixed_abs, tag = 'smem constant byte address 0x4 - core index']
  #allocation1 [shape = 'u32[144,128]{1,0:T(1,128)}', space=vmem, size = 0x12000, scoped, tag = 'internal scratch']
  %s0 = inlined_call_operand.hbm [shape: f32[8,32], index: 0, kind: input, shape index: {}]
  %s1 = inlined_call_operand.hbm [shape: f32[8,16], index: 1, kind: input, shape index: {}]
  %s2 = inlined_call_operand.hbm [shape: f32[32,32], index: 2, kind: input, shape index: {}]
  %s3 = inlined_call_operand.vmem [shape: f32[1,32], index: 3, kind: input, shape index: {}]
  %s4 = inlined_call_operand.hbm [shape: f32[8,48], index: 4, kind: output, shape index: {}]
  %s5 = sld [smem:[#allocation0]]
  $region38: #{tpu_custom_call.1} parent=0
    _
  %s7 = ssub.s32 1, %s5
  %s8 = scalar_select 0, %s7, %s5
  $region1: #{tpu_custom_call.1} parent=0
    #allocation2 [shape = 'u8[4096]{0}', space=vmem, size = 0x1000, scoped, tag = 'input window, operand 0, single buffered']
    #allocation3 [shape = 's32[1]{0}', space=sflag, size = 0x4, scoped, tag = 'scoped memory for tpu_custom_call.1']
    #allocation4 [shape = 's32[1]{0}', space=sflag, size = 0x4, scoped, tag = 'scoped memory for tpu_custom_call.1']
    #allocation5 [shape = 'u8[4096]{0}', space=vmem, size = 0x1000, scoped, tag = 'input window, operand 1, single buffered']
    #allocation6 [shape = 's32[1]{0}', space=sflag, size = 0x4, scoped, tag = 'scoped memory for tpu_custom_call.1']
    #allocation7 [shape = 'u8[16384]{0}', space=vmem, size = 0x4000, scoped, tag = 'input window, operand 2, single buffered']
    #allocation8 [shape = 'u8[4096]{0}', space=vmem, size = 0x1000, scoped, tag = 'output window, operand 0, single buffered']
    %9 = vsyncpa [#allocation3], 0
    %10 = vsyncpa [#allocation6], 0
    %11 = vsyncpa [#allocation4], 0
    // Predicated region
    $region2: #{tpu_custom_call.1} parent=1 // pred_check
      _
    $region3: #{tpu_custom_call.1} parent=1 // pred_check_branch
      %13 = sbr.rel (0) target = $region5
    $region4: #{tpu_custom_call.1} parent=1 // pred_region
      %s15 = ssub.s32 128, 128
      %16 = vsyncadd [#allocation3], %s15
      %s18 = sshll.u32 [#allocation2], 4
      %s19 = int_to_ptr.vmem [resolvable:$true] %s18
      %21 = dma.hbm_to_vmem [thread:$0]  %s0, 128, %s19, [#allocation3]
    $region5: #{tpu_custom_call.1} parent=1 // pred_fallthru
      _
    // Predicated region
    $region6: #{tpu_custom_call.1} parent=1 // pred_check
      _
    $region7: #{tpu_custom_call.1} parent=1 // pred_check_branch
      %23 = sbr.rel (0) target = $region9
    $region8: #{tpu_custom_call.1} parent=1 // pred_region
      %s25 = ssub.s32 128, 128
      %26 = vsyncadd [#allocation6], %s25
      %s28 = sshll.u32 [#allocation5], 4
      %s29 = int_to_ptr.vmem [resolvable:$true] %s28
      %31 = dma.hbm_to_vmem [thread:$0]  %s1, 128, %s29, [#allocation6]
    $region9: #{tpu_custom_call.1} parent=1 // pred_fallthru
      _
    // Predicated region
    $region10: #{tpu_custom_call.1} parent=1 // pred_check
      _
    $region11: #{tpu_custom_call.1} parent=1 // pred_check_branch
      %33 = sbr.rel (0) target = $region13
    $region12: #{tpu_custom_call.1} parent=1 // pred_region
      %s35 = ssub.s32 512, 512
      %36 = vsyncadd [#allocation6], %s35
      %s37 = sshll.u32 [#allocation7], 4
      %s38 = int_to_ptr.vmem [resolvable:$true] %s37
      %43 = dma.hbm_to_vmem [thread:$0]  %s2, 512, %s38, [#allocation6], 128, 128, 8
    $region13: #{tpu_custom_call.1} parent=1 // pred_fallthru
      _
    // Predicated region
    $region14: #{tpu_custom_call.1} parent=1 // pred_check
      _
    $region15: #{tpu_custom_call.1} parent=1 // pred_check_branch
      %45 = sbr.rel (0) target = $region17
    $region16: #{tpu_custom_call.1} parent=1 // pred_region
      _
    $region17: #{tpu_custom_call.1} parent=1 // pred_fallthru
      _
    // Predicated region
    $region18: #{tpu_custom_call.1} parent=1 // pred_check
      _
    $region19: #{tpu_custom_call.1} parent=1 // pred_check_branch
      %47 = sbr.rel (0) target = $region21
    $region20: #{tpu_custom_call.1} parent=1 // pred_region
      %48 = dma.done [#allocation3], 128
    $region21: #{tpu_custom_call.1} parent=1 // pred_fallthru
      _
    // Predicated region
    $region22: #{tpu_custom_call.1} parent=1 // pred_check
      _
    $region23: #{tpu_custom_call.1} parent=1 // pred_check_branch
      %50 = sbr.rel (0) target = $region25
    $region24: #{tpu_custom_call.1} parent=1 // pred_region
      %51 = dma.done [#allocation6], 128
    $region25: #{tpu_custom_call.1} parent=1 // pred_fallthru
      _
    // Predicated region
    $region26: #{tpu_custom_call.1} parent=1 // pred_check
      _
    $region27: #{tpu_custom_call.1} parent=1 // pred_check_branch
      %53 = sbr.rel (0) target = $region29
    $region28: #{tpu_custom_call.1} parent=1 // pred_region
      %54 = dma.done [#allocation6], 512
    $region29: #{tpu_custom_call.1} parent=1 // pred_fallthru
      _
    %v55 = vld [vmem:[#allocation2] sm:$0xff]
    %v56 = vld [vmem:[#allocation7] sm:$0xff]
    %v57 = vld [vmem:[#allocation7 + $0x8] sm:$0xff]
    %v58 = vld [vmem:[#allocation7 + $0x10] sm:$0xff]
    %v59 = vld [vmem:[#allocation7 + $0x18] sm:$0xff]
    %v60 = vld [vmem:[%s3] sm:$0x1]
    %v62 = vlaneseq
    %v63 = vshrl.u32 %v62, 7
    %v64 = vsub.s32 0, %v63
    %v65 = vrot.slane %v60, %v64
    %vm67 = vcmask 261120
    %v69 = vsel %vm67, %v55, 0
    %71 = vmatprep.subr.mxu0 0.0
    %72 = vmatpush1.msra.mxu0 0.0
    %73 = vmatprep.subr.mxu0 0.0
    %74 = vmatpush1.msra.mxu0 0.0
    %75 = vmatprep.subr.mxu0 0.0
    %76 = vmatpush1.msra.mxu0 0.0
    %77 = vmatprep.subr.mxu0 0.0
    %78 = vmatpush1.msra.mxu0 0.0
    %79 = vmatprep.subr.mxu0 0.0
    %80 = vmatpush1.msra.mxu0 0.0
    %81 = vmatprep.subr.mxu0 0.0
    %82 = vmatpush1.msra.mxu0 0.0
    %83 = vmatprep.subr.mxu0 0.0
    %84 = vmatpush1.msra.mxu0 0.0
    %85 = vmatprep.subr.mxu0 0.0
    %86 = vmatpush1.msra.mxu0 0.0
    %87 = vmatprep.subr.mxu0 0.0
    %88 = vmatpush1.msra.mxu0 0.0
    %89 = vmatprep.subr.mxu0 0.0
    %90 = vmatpush1.msra.mxu0 0.0
    %91 = vmatprep.subr.mxu0 0.0
    %92 = vmatpush1.msra.mxu0 0.0
    %93 = vmatprep.subr.mxu0 0.0
    %94 = vmatpush1.msra.mxu0 0.0
    %95 = vmatprep.subr.mxu0 0.0
    %96 = vmatpush1.msra.mxu0 %v59
    %97 = vmatprep.subr.mxu0 0.0
    %98 = vmatpush1.msra.mxu0 %v58
    %99 = vmatprep.subr.mxu0 0.0
    %100 = vmatpush1.msra.mxu0 %v57
    %101 = vmatprep.subr.mxu0 0.0
    %102 = vmatpush1.msra.mxu0 %v56
    %103 = vmatprep.subr.mxu0 0.0
    %104 = vmatpush2.msra.mxu0 0.0
    %105 = vmatprep.subr.mxu0 0.0
    %106 = vmatpush2.msra.mxu0 0.0
    %107 = vmatprep.subr.mxu0 0.0
    %108 = vmatpush2.msra.mxu0 0.0
    %109 = vmatprep.subr.mxu0 0.0
    %110 = vmatpush2.msra.mxu0 0.0
    %111 = vmatprep.subr.mxu0 0.0
    %112 = vmatpush2.msra.mxu0 0.0
    %113 = vmatprep.subr.mxu0 0.0
    %114 = vmatpush2.msra.mxu0 0.0
    %115 = vmatprep.subr.mxu0 0.0
    %116 = vmatpush2.msra.mxu0 0.0
    %117 = vmatprep.subr.mxu0 0.0
    %118 = vmatpush2.msra.mxu0 0.0
    %119 = vmatprep.subr.mxu0 0.0
    %120 = vmatpush2.msra.mxu0 0.0
    %121 = vmatprep.subr.mxu0 0.0
    %122 = vmatpush2.msra.mxu0 0.0
    %123 = vmatprep.subr.mxu0 0.0
    %124 = vmatpush2.msra.mxu0 0.0
    %125 = vmatprep.subr.mxu0 0.0
    %126 = vmatpush2.msra.mxu0 0.0
    %127 = vmatprep.subr.mxu0 0.0
    %128 = vmatpush2.msra.mxu0 0.0
    %129 = vmatprep.subr.mxu0 0.0
    %130 = vmatpush2.msra.mxu0 0.0
    %131 = vmatprep.subr.mxu0 0.0
    %132 = vmatpush2.msra.mxu0 0.0
    %133 = vmatprep.subr.mxu0 0.0
    %134 = vmatpush2.msra.mxu0 0.0
    %135 = vmatprep.mubr.f32.mxu0 0.0
    %136 = vmatmul.mubr.f32.gmra.mxu0 %v69
    %v137 = vpop.f32.mrf.mxu0
    %v138 = vadd.f32 %v65, %v137
    %v139 = vpop.f32.mrf.mxu0
    %140 = vdwg.mxu0
    %v141 = vmax.f32 %v138, -1e-10
    %v142 = vmin.f32 %v141, 10.0
    %v143 = vmul.f32 %v142, 0.5
    %v144 = vmul.f32 %v143, 1.442695
    %v145 = vpow.pop %v144
    %v146 = vld [vmem:[#allocation5] sm:$0xff]
    %148 = vrot.lane.b32.xlu0 %v146, 16
    %v149 = vpop.permute.xlu0 %148
    %v151 = vmul.f32 %v145, %v149
    %153 = vrot.lane.b32.xlu0 %v151, 112
    %v154 = vpop.permute.xlu0 %153
    %v156 = vadd.f32 %v138, %v154
    %vm157 = vcmask 130048
    %158 = vst.msk [vmem:[#allocation8] sm:$0xff] %vm157, %v156
    %160 = vrot.lane.b32.xlu0 %v138, 16
    %v161 = vpop.permute.xlu0 %160
    %vm163 = vcmask 261248
    %164 = vst.msk [vmem:[#allocation8] sm:$0xff] %vm163, %v161
    %166 = vrot.lane.b32.xlu0 %v142, 16
    %v167 = vpop.permute.xlu0 %166
    %vm169 = vcmask 392448
    %170 = vst.msk [vmem:[#allocation8] sm:$0xff] %vm169, %v167
    // Predicated region
    $region30: #{tpu_custom_call.1} parent=1 // pred_check
      _
    $region31: #{tpu_custom_call.1} parent=1 // pred_check_branch
      %172 = sbr.rel (0) target = $region33
    $region32: #{tpu_custom_call.1} parent=1 // pred_region
      %s174 = ssub.s32 128, 128
      %175 = vsyncadd [#allocation4], %s174
      %s177 = sshll.u32 [#allocation8], 4
      %s178 = int_to_ptr.vmem [resolvable:$true] %s177
      %180 = dma.vmem_to_hbm [thread:$0]  %s178, 128, %s4, [#allocation4]
    $region33: #{tpu_custom_call.1} parent=1 // pred_fallthru
      _
    // Predicated region
    $region34: #{tpu_custom_call.1} parent=1 // pred_check
      _
    $region35: #{tpu_custom_call.1} parent=1 // pred_check_branch
      %182 = sbr.rel (0) target = $region37
    $region36: #{tpu_custom_call.1} parent=1 // pred_region
      %183 = dma.done [#allocation4], 128
    $region37: #{tpu_custom_call.1} parent=1 // pred_fallthru
      _
    %184 = vsyncpa [#allocation3], 1
    %185 = vsyncpa [#allocation6], 1
    %186 = vsyncpa [#allocation4], 1

</llo_original>
